<compile_context>
chip_gen: v7x
topology: tpu7x:2x2x1
jax: 0.10.0
libtpu: 0.0.40
codegen_flags: <defaults>
</compile_context>

<pallas_src>
import functools

import jax
import jax.numpy as jnp
from jax.experimental import pallas as pl
from jax.experimental.pallas import tpu as pltpu


# ---------------------------------------------------------------------------
# Kernels
# ---------------------------------------------------------------------------
def _accumulate_and_finalize(x_tile, w_ref, b_ref, o_ref, acc_ref):
    """Shared body: acc += x_tile @ w_tile; add bias + write out on the last K step."""
    k = pl.program_id(2)

    @pl.when(k == 0)
    def _init():
        acc_ref[...] = jnp.zeros_like(acc_ref)

    acc_ref[...] += jnp.dot(
        x_tile, w_ref[...], preferred_element_type=jnp.float32
    )

    @pl.when(k == pl.num_programs(2) - 1)
    def _finalize():
        # Bias is added exactly once, after the full K reduction.
        o_ref[...] = (acc_ref[...] + b_ref[...]).astype(o_ref.dtype)


def _noisy_linear_eval_kernel(x_ref, w_ref, b_ref, o_ref, acc_ref):
    # eval path: x_new = x (no noise operand at all)
    _accumulate_and_finalize(x_ref[...], w_ref, b_ref, o_ref, acc_ref)


def _noisy_linear_train_kernel(x_ref, noise_ref, w_ref, b_ref, o_ref, acc_ref):
    # training path: x_new = x + noise (elementwise add fused with the matmul tile)
    _accumulate_and_finalize(x_ref[...] + noise_ref[...], w_ref, b_ref, o_ref, acc_ref)


# ---------------------------------------------------------------------------
# Wrapper
# ---------------------------------------------------------------------------
def _round_up(x, m):
    return ((x + m - 1) // m) * m


def _pad2d(a, rows, cols):
    pr = rows - a.shape[0]
    pc = cols - a.shape[1]
    if pr or pc:
        a = jnp.pad(a, ((0, pr), (0, pc)))
    return a


@functools.partial(jax.jit, static_argnames=("noise_stddev", "training"))
def noisy_linear(x, w, b, *, noise_stddev=0.1, training=False, key=None):
    """Forward pass of NoisyLinear.

    x: (B, IN) f32, w: (IN, OUT) f32, b: (OUT,) f32.
    training=True adds Gaussian noise N(0, noise_stddev) (shape of x) before the matmul,
    exactly matching the PyTorch module's forward.
    """
    B, IN = x.shape
    IN_w, OUT = w.shape
    assert IN == IN_w

    # MXU / vreg aligned tile sizes (128-multiples on the lane dims, 8-multiple on batch).
    tm = min(128, _round_up(B, 8))
    tn = min(256, _round_up(OUT, 128))
    tk = min(512, _round_up(IN, 128))

    m_pad = _round_up(B, tm)
    n_pad = _round_up(OUT, tn)
    k_pad = _round_up(IN, tk)

    x_p = _pad2d(x.astype(jnp.float32), m_pad, k_pad)
    w_p = _pad2d(w.astype(jnp.float32), k_pad, n_pad)
    b_p = _pad2d(b.reshape(1, OUT).astype(jnp.float32), 1, n_pad)

    grid = (m_pad // tm, n_pad // tn, k_pad // tk)

    x_spec = pl.BlockSpec((tm, tk), lambda i, j, k: (i, k))
    w_spec = pl.BlockSpec((tk, tn), lambda i, j, k: (k, j))
    b_spec = pl.BlockSpec((1, tn), lambda i, j, k: (0, j))   # replicated over k and i
    o_spec = pl.BlockSpec((tm, tn), lambda i, j, k: (i, j))

    if training:
        assert key is not None, "training=True requires a PRNG key"
        noise = noise_stddev * jax.random.normal(key, x.shape, dtype=jnp.float32)
        noise_p = _pad2d(noise, m_pad, k_pad)
        kernel = _noisy_linear_train_kernel
        in_specs = [x_spec, x_spec, w_spec, b_spec]
        operands = (x_p, noise_p, w_p, b_p)
        input_bytes = 4 * (2 * m_pad * k_pad + k_pad * n_pad + n_pad)
    else:
        kernel = _noisy_linear_eval_kernel
        in_specs = [x_spec, w_spec, b_spec]
        operands = (x_p, w_p, b_p)
        input_bytes = 4 * (m_pad * k_pad + k_pad * n_pad + n_pad)

    out_padded = pl.pallas_call(
        kernel,
        out_shape=jax.ShapeDtypeStruct((m_pad, n_pad), jnp.float32),
        grid_spec=pltpu.PrefetchScalarGridSpec(
            num_scalar_prefetch=0,
            grid=grid,
            in_specs=in_specs,
            out_specs=o_spec,
            scratch_shapes=[pltpu.VMEM((tm, tn), jnp.float32)],
        ),
        compiler_params=pltpu.CompilerParams(
            dimension_semantics=("parallel", "parallel", "arbitrary"),
            vmem_limit_bytes=32 * 1024 * 1024,
        ),
        cost_estimate=pl.CostEstimate(
            flops=2 * m_pad * k_pad * n_pad,
            transcendentals=0,
            bytes_accessed=input_bytes + 4 * m_pad * n_pad,
        ),
    )(*operands)

    return out_padded[:B, :OUT]


def init_noisy_linear_params(key, input_size, output_size):
    """Deterministic xavier_uniform_ for w (bound = sqrt(6/(fan_in+fan_out))), zeros for b."""
    bound = (6.0 / (input_size + output_size)) ** 0.5
    w = jax.random.uniform(
        key, (input_size, output_size), dtype=jnp.float32, minval=-bound, maxval=bound
    )
    b = jnp.zeros((output_size,), dtype=jnp.float32)
    return w, b


# ---------------------------------------------------------------------------
# Self-test
# ---------------------------------------------------------------------------
if __name__ == "__main__":
    INPUT_SIZE, OUTPUT_SIZE, BATCH = 2, 4, 8
    NOISE_STDDEV = 0.1

    root = jax.random.PRNGKey(0)
    k_w, k_x, k_noise, k_w2, k_b2, k_x2, k_noise2 = jax.random.split(root, 7)

    # --- module-consistent small shapes (input_size=2, output_size=4) ---
    w, b = init_noisy_linear_params(k_w, INPUT_SIZE, OUTPUT_SIZE)
    x = jax.random.uniform(
        k_x, (BATCH, INPUT_SIZE), dtype=jnp.float32, minval=-1.0, maxval=1.0
    )

    out_eval = jax.block_until_ready(noisy_linear(x, w, b, training=False))
    out_train = jax.block_until_ready(
        noisy_linear(x, w, b, noise_stddev=NOISE_STDDEV, training=True, key=k_noise)
    )

    ref_eval = x @ w + b
    noise_ref = NOISE_STDDEV * jax.random.normal(k_noise, x.shape, dtype=x.dtype)
    ref_train = (x + noise_ref) @ w + b
    assert jnp.allclose(out_eval, ref_eval, atol=1e-5, rtol=1e-5)
    assert jnp.allclose(out_train, ref_train, atol=1e-5, rtol=1e-5)

    # --- larger multi-tile grid check (exercises accumulator init/finalize,
    #     bias-added-once logic and the padding/slicing path) ---
    B2, IN2, OUT2 = 300, 640, 384
    w2, _ = init_noisy_linear_params(k_w2, IN2, OUT2)
    b2 = jax.random.normal(k_b2, (OUT2,), dtype=jnp.float32)  # nonzero bias to catch bias bugs
    x2 = jax.random.uniform(
        k_x2, (B2, IN2), dtype=jnp.float32, minval=-1.0, maxval=1.0
    )

    out2_eval = jax.block_until_ready(noisy_linear(x2, w2, b2, training=False))
    out2_train = jax.block_until_ready(
        noisy_linear(x2, w2, b2, noise_stddev=NOISE_STDDEV, training=True, key=k_noise2)
    )

    ref2_eval = x2 @ w2 + b2
    noise2 = NOISE_STDDEV * jax.random.normal(k_noise2, x2.shape, dtype=jnp.float32)
    ref2_train = (x2 + noise2) @ w2 + b2
    assert jnp.allclose(out2_eval, ref2_eval, atol=1e-2, rtol=1e-2)
    assert jnp.allclose(out2_train, ref2_train, atol=1e-2, rtol=1e-2)

    print("KERNEL_OK")
</pallas_src>

<mosaic_0001>
module attributes {stable_mosaic.version = 11 : i64} {
  func.func @_noisy_linear_eval_kernel(%arg0: i32, %arg1: i32, %arg2: i32, %arg3: memref<8x128xf32, #tpu.memory_space<vmem>>, %arg4: memref<128x128xf32, #tpu.memory_space<vmem>>, %arg5: memref<1x128xf32, #tpu.memory_space<vmem>>, %arg6: memref<8x128xf32, #tpu.memory_space<vmem>>, %arg7: memref<8x128xf32, #tpu.memory_space<vmem>>) attributes {dimension_semantics = [#tpu.dimension_semantics<parallel>, #tpu.dimension_semantics<parallel>, #tpu.dimension_semantics<arbitrary>], iteration_bounds = array<i64: 1, 1, 1>, scalar_prefetch = 0 : i64, scratch_operands = 1 : i64, tpu.core_type = #tpu.core_type<tc>, window_params = [{transform_indices = @transform_0, window_bounds = array<i64: 8, 128>}, {transform_indices = @transform_1, window_bounds = array<i64: 128, 128>}, {transform_indices = @transform_2, window_bounds = array<i64: 1, 128>}, {transform_indices = @transform_3, window_bounds = array<i64: 8, 128>}]} {
    %c0 = arith.constant 0 : index
    %c0_0 = arith.constant 0 : index
    %0 = vector.load %arg3[%c0, %c0_0] : memref<8x128xf32, #tpu.memory_space<vmem>>, vector<8x128xf32>
    %c0_i32 = arith.constant 0 : i32
    %1 = arith.cmpi eq, %arg2, %c0_i32 : i32
    %2 = arith.extui %1 : i1 to i32
    %c0_i32_1 = arith.constant 0 : i32
    %3 = arith.cmpi ne, %2, %c0_i32_1 : i32
    scf.if %3 {
      %cst_10 = arith.constant 0.000000e+00 : f32
      %12 = vector.broadcast %cst_10 : f32 to vector<8x128xf32>
      %c0_11 = arith.constant 0 : index
      %c0_12 = arith.constant 0 : index
      %13 = vector.load %arg7[%c0_11, %c0_12] : memref<8x128xf32, #tpu.memory_space<vmem>>, vector<8x128xf32>
      tpu.vector_store %arg7[%c0_11, %c0_12], %12 {strides = array<i32>} : memref<8x128xf32, #tpu.memory_space<vmem>>, vector<8x128xf32>,
    } else {
    }
    %c0_2 = arith.constant 0 : index
    %c0_3 = arith.constant 0 : index
    %4 = vector.load %arg7[%c0_2, %c0_3] : memref<8x128xf32, #tpu.memory_space<vmem>>, vector<8x128xf32>
    %c0_4 = arith.constant 0 : index
    %c0_5 = arith.constant 0 : index
    %5 = vector.load %arg4[%c0_4, %c0_5] : memref<128x128xf32, #tpu.memory_space<vmem>>, vector<128x128xf32>
    %cst = arith.constant dense<0.000000e+00> : vector<8x128xf32>
    %6 = tpu.matmul %0, %5, %cst {dimension_numbers = #tpu.dot_dimension_numbers<[1], [0], [0], [1], [0, 0, 1, 1], [], []>} : vector<8x128xf32>, vector<128x128xf32>, vector<8x128xf32> -> vector<8x128xf32>
    %7 = arith.addf %4, %6 : vector<8x128xf32>
    %c0_6 = arith.constant 0 : index
    %c0_7 = arith.constant 0 : index
    %8 = vector.load %arg7[%c0_6, %c0_7] : memref<8x128xf32, #tpu.memory_space<vmem>>, vector<8x128xf32>
    tpu.vector_store %arg7[%c0_6, %c0_7], %7 {strides = array<i32>} : memref<8x128xf32, #tpu.memory_space<vmem>>, vector<8x128xf32>,
    %c0_i32_8 = arith.constant 0 : i32
    %9 = arith.cmpi eq, %arg2, %c0_i32_8 : i32
    %10 = arith.extui %9 : i1 to i32
    %c0_i32_9 = arith.constant 0 : i32
    %11 = arith.cmpi ne, %10, %c0_i32_9 : i32
    scf.if %11 {
      %c0_10 = arith.constant 0 : index
      %c0_11 = arith.constant 0 : index
      %12 = vector.load %arg7[%c0_10, %c0_11] : memref<8x128xf32, #tpu.memory_space<vmem>>, vector<8x128xf32>
      %c0_12 = arith.constant 0 : index
      %c0_13 = arith.constant 0 : index
      %13 = vector.load %arg5[%c0_12, %c0_13] : memref<1x128xf32, #tpu.memory_space<vmem>>, vector<1x128xf32>
      %14 = vector.broadcast %13 : vector<1x128xf32> to vector<8x128xf32>
      %15 = arith.addf %12, %14 : vector<8x128xf32>
      %c0_14 = arith.constant 0 : index
      %c0_15 = arith.constant 0 : index
      %16 = vector.load %arg6[%c0_14, %c0_15] : memref<8x128xf32, #tpu.memory_space<vmem>>, vector<8x128xf32>
      tpu.vector_store %arg6[%c0_14, %c0_15], %15 {strides = array<i32>} : memref<8x128xf32, #tpu.memory_space<vmem>>, vector<8x128xf32>,
    } else {
    }
    return
  }
  func.func @transform_0(%arg0: i32, %arg1: i32, %arg2: i32) -> (i32, i32) {
    %c0_i32 = arith.constant 0 : i32
    return %arg0, %arg2 : i32, i32
  }
  func.func @transform_1(%arg0: i32, %arg1: i32, %arg2: i32) -> (i32, i32) {
    %c0_i32 = arith.constant 0 : i32
    return %arg2, %arg1 : i32, i32
  }
  func.func @transform_2(%arg0: i32, %arg1: i32, %arg2: i32) -> (i32, i32) {
    %c0_i32 = arith.constant 0 : i32
    %c0_i32_0 = arith.constant 0 : i32
    return %c0_i32, %arg1 : i32, i32
  }
  func.func @transform_3(%arg0: i32, %arg1: i32, %arg2: i32) -> (i32, i32) {
    %c0_i32 = arith.constant 0 : i32
    return %arg0, %arg1 : i32, i32
  }
}

</mosaic_0001>

<llo_original>
// kernel: noisy_linear.1
$region0: #{noisy_linear.1}
  #allocation0 [shape = 'u32[]', space=smem, size = 0x4, offset = 0x4, fixed_abs, tag = 'smem constant byte address 0x4 - core index']
  #allocation1 [shape = 'u32[144,128]{1,0:T(1,128)}', space=vmem, size = 0x12000, scoped, tag = 'internal scratch']
  #allocation2 [shape = 'f32[8,128]{1,0:T(8,128)}', space=vmem, size = 0x1000, scoped, tag = 'scratch operand']
  %s0 = inlined_call_operand.vmem [shape: f32[8,128], index: 0, kind: input, shape index: {}]
  %s1 = inlined_call_operand.vmem [shape: f32[128,128], index: 1, kind: input, shape index: {}]
  %s2 = inlined_call_operand.vmem [shape: f32[1,128], index: 2, kind: input, shape index: {}]
  %s3 = inlined_call_operand.vmem [shape: f32[8,128], index: 3, kind: output, shape index: {}]
  %s4 = sld [smem:[#allocation0]]
  $region30: #{noisy_linear.1} parent=0
    _
  %s6 = ssub.s32 1, %s4
  %s7 = scalar_select 0, %s6, %s4
  // Predicated region
  $region2: #{noisy_linear.1} parent=0 // pred_check
    _
  $region3: #{noisy_linear.1} parent=0 // pred_check_branch
    %9 = sbr.rel (0) target = $region5
  $region4: #{noisy_linear.1} parent=0 // pred_region
    _
  $region5: #{noisy_linear.1} parent=0 // pred_fallthru
    _
  // Predicated region
  $region6: #{noisy_linear.1} parent=0 // pred_check
    _
  $region7: #{noisy_linear.1} parent=0 // pred_check_branch
    %11 = sbr.rel (0) target = $region9
  $region8: #{noisy_linear.1} parent=0 // pred_region
    _
  $region9: #{noisy_linear.1} parent=0 // pred_fallthru
    _
  // Predicated region
  $region10: #{noisy_linear.1} parent=0 // pred_check
    _
  $region11: #{noisy_linear.1} parent=0 // pred_check_branch
    %13 = sbr.rel (0) target = $region13
  $region12: #{noisy_linear.1} parent=0 // pred_region
    _
  $region13: #{noisy_linear.1} parent=0 // pred_fallthru
    _
  %v14 = vld [vmem:[%s0] sm:$0xff]
  %p15 = scmp.eq.s32.totalorder 0, 0
  // Predicated region
  $region14: #{noisy_linear.1} parent=0 // pred_check
    %p16 = pneg %p15
  $region15: #{noisy_linear.1} parent=0 // pred_check_branch
    %18 = sbr.rel (%p16) target = $region17
  $region16: #{noisy_linear.1} parent=0 // pred_region
    %19 = vst [vmem:[#allocation2] sm:$0xff] 0.0
  $region17: #{noisy_linear.1} parent=0 // pred_fallthru
    _
  %v20 = vld [vmem:[#allocation2] sm:$0xff]
  %v21 = vld [vmem:[%s1] sm:$0xff]
  %v22 = vld [vmem:[%s1 + $0x8] sm:$0xff]
  %v23 = vld [vmem:[%s1 + $0x10] sm:$0xff]
  %v24 = vld [vmem:[%s1 + $0x18] sm:$0xff]
  %v25 = vld [vmem:[%s1 + $0x20] sm:$0xff]
  %v26 = vld [vmem:[%s1 + $0x28] sm:$0xff]
  %v27 = vld [vmem:[%s1 + $0x30] sm:$0xff]
  %v28 = vld [vmem:[%s1 + $0x38] sm:$0xff]
  %v29 = vld [vmem:[%s1 + $0x40] sm:$0xff]
  %v30 = vld [vmem:[%s1 + $0x48] sm:$0xff]
  %v31 = vld [vmem:[%s1 + $0x50] sm:$0xff]
  %v32 = vld [vmem:[%s1 + $0x58] sm:$0xff]
  %v33 = vld [vmem:[%s1 + $0x60] sm:$0xff]
  %v34 = vld [vmem:[%s1 + $0x68] sm:$0xff]
  %v35 = vld [vmem:[%s1 + $0x70] sm:$0xff]
  %v36 = vld [vmem:[%s1 + $0x78] sm:$0xff]
  %37 = vmatprep.subr.mxu0 0.0
  %38 = vmatpush1.msra.mxu0 %v21
  %39 = vmatprep.subr.mxu0 0.0
  %40 = vmatpush1.msra.mxu0 %v22
  %41 = vmatprep.subr.mxu0 0.0
  %42 = vmatpush1.msra.mxu0 %v23
  %43 = vmatprep.subr.mxu0 0.0
  %44 = vmatpush1.msra.mxu0 %v24
  %45 = vmatprep.subr.mxu0 0.0
  %46 = vmatpush1.msra.mxu0 %v25
  %47 = vmatprep.subr.mxu0 0.0
  %48 = vmatpush1.msra.mxu0 %v26
  %49 = vmatprep.subr.mxu0 0.0
  %50 = vmatpush1.msra.mxu0 %v27
  %51 = vmatprep.subr.mxu0 0.0
  %52 = vmatpush1.msra.mxu0 %v28
  %53 = vmatprep.subr.mxu0 0.0
  %54 = vmatpush1.msra.mxu0 %v29
  %55 = vmatprep.subr.mxu0 0.0
  %56 = vmatpush1.msra.mxu0 %v30
  %57 = vmatprep.subr.mxu0 0.0
  %58 = vmatpush1.msra.mxu0 %v31
  %59 = vmatprep.subr.mxu0 0.0
  %60 = vmatpush1.msra.mxu0 %v32
  %61 = vmatprep.subr.mxu0 0.0
  %62 = vmatpush1.msra.mxu0 %v33
  %63 = vmatprep.subr.mxu0 0.0
  %64 = vmatpush1.msra.mxu0 %v34
  %65 = vmatprep.subr.mxu0 0.0
  %66 = vmatpush1.msra.mxu0 %v35
  %67 = vmatprep.subr.mxu0 0.0
  %68 = vmatpush1.msra.mxu0 %v36
  %69 = vmatprep.subr.mxu0 0.0
  %70 = vmatpush1.msra.mxu0 0.0
  %71 = vmatprep.subr.mxu0 0.0
  %72 = vmatpush1.msra.mxu0 0.0
  %73 = vmatprep.subr.mxu0 0.0
  %74 = vmatpush1.msra.mxu0 0.0
  %75 = vmatprep.subr.mxu0 0.0
  %76 = vmatpush1.msra.mxu0 0.0
  %77 = vmatprep.subr.mxu0 0.0
  %78 = vmatpush1.msra.mxu0 0.0
  %79 = vmatprep.subr.mxu0 0.0
  %80 = vmatpush1.msra.mxu0 0.0
  %81 = vmatprep.subr.mxu0 0.0
  %82 = vmatpush1.msra.mxu0 0.0
  %83 = vmatprep.subr.mxu0 0.0
  %84 = vmatpush1.msra.mxu0 0.0
  %85 = vmatprep.subr.mxu0 0.0
  %86 = vmatpush1.msra.mxu0 0.0
  %87 = vmatprep.subr.mxu0 0.0
  %88 = vmatpush1.msra.mxu0 0.0
  %89 = vmatprep.subr.mxu0 0.0
  %90 = vmatpush1.msra.mxu0 0.0
  %91 = vmatprep.subr.mxu0 0.0
  %92 = vmatpush1.msra.mxu0 0.0
  %93 = vmatprep.subr.mxu0 0.0
  %94 = vmatpush1.msra.mxu0 0.0
  %95 = vmatprep.subr.mxu0 0.0
  %96 = vmatpush1.msra.mxu0 0.0
  %97 = vmatprep.subr.mxu0 0.0
  %98 = vmatpush1.msra.mxu0 0.0
  %99 = vmatprep.subr.mxu0 0.0
  %100 = vmatpush1.msra.mxu0 0.0
  %101 = vmatprep.mubr.f32.mxu0 0.0
  %102 = vmatmul.mubr.f32.gmra.mrb[0].mxu0 %v14
  %v103 = vpop.f32.mrb[0].mxu0
  %v104 = vadd.f32 0.0, %v103
  %v105 = vpop.f32.mrb[0].mxu0
  %106 = vdwg.mxu0
  %v107 = vadd.f32 %v20, %v104
  %108 = vst [vmem:[#allocation2] sm:$0xff] %v107
  // Predicated region
  $region18: #{noisy_linear.1} parent=0 // pred_check
    %p109 = pneg %p15
  $region19: #{noisy_linear.1} parent=0 // pred_check_branch
    %111 = sbr.rel (%p109) target = $region21
  $region20: #{noisy_linear.1} parent=0 // pred_region
    %v112 = vld [vmem:[#allocation2] sm:$0xff]
    %v113 = vld [vmem:[%s2] sm:$0x1]
    %v115 = vlaneseq
    %v116 = vshrl.u32 %v115, 7
    %v117 = vsub.s32 0, %v116
    %v118 = vrot.slane %v113, %v117
    %v120 = vadd.f32 %v112, %v118
    %121 = vst [vmem:[%s3] sm:$0xff] %v120
  $region21: #{noisy_linear.1} parent=0 // pred_fallthru
    _
  // Predicated region
  $region22: #{noisy_linear.1} parent=0 // pred_check
    _
  $region23: #{noisy_linear.1} parent=0 // pred_check_branch
    %123 = sbr.rel (0) target = $region25
  $region24: #{noisy_linear.1} parent=0 // pred_region
    _
  $region25: #{noisy_linear.1} parent=0 // pred_fallthru
    _
  // Predicated region
  $region26: #{noisy_linear.1} parent=0 // pred_check
    _
  $region27: #{noisy_linear.1} parent=0 // pred_check_branch
    %125 = sbr.rel (0) target = $region29
  $region28: #{noisy_linear.1} parent=0 // pred_region
    _
  $region29: #{noisy_linear.1} parent=0 // pred_fallthru
    _

</llo_original>
